<compile_context>
chip_gen: v7x
topology: tpu7x:2x2x1
jax: 0.10.0
libtpu: 0.0.40
codegen_flags: <defaults>
</compile_context>

<pallas_src>
import functools

import jax
import jax.numpy as jnp
from jax.experimental import pallas as pl
from jax.experimental.pallas import tpu as pltpu

_NEG_BIG = -1e30   # finite "-inf": padded rows/cols never create NaN/Inf math
_EPS2 = 1e-24      # (torch F.normalize eps = 1e-12) ** 2


def _l2_normalize(x):
    # x: [rows, D] f32 -> unit-L2 rows (matches torch F.normalize semantics).
    sumsq = jnp.sum(x * x, axis=1, keepdims=True)
    return x * jax.lax.rsqrt(jnp.maximum(sumsq, jnp.float32(_EPS2)))


def _contrastive_loss_kernel(
    img_ref,       # VMEM (T, D) matmul_dtype  normalized image rows * (1/temp), row-tile i
    txt_ref,       # VMEM (T, D) matmul_dtype  normalized text rows, col-tile j
    out_ref,       # VMEM (1,1) f32            scalar loss (written at last grid step)
    cmax_ref,      # VMEM (n_j,1,T)            per-column running max
    csum_ref,      # VMEM (n_j,1,T)            per-column running sum(exp)
    rmax_ref,      # VMEM (T,1)                per-row running max (current row tile)
    rsum_ref,      # VMEM (T,1)                per-row running sum(exp)
    rowacc_ref,    # VMEM (1,1)                sum_i lse_row[i]
    colacc_ref,    # VMEM (1,1)                sum_j lse_col[j]
    diagacc_ref,   # VMEM (1,1)                sum_i logits[i,i]
    *, batch, masked,
):
    i = pl.program_id(0)          # row-tile index
    j = pl.program_id(1)          # col-tile index (reduction axis, last)
    n_i = pl.num_programs(0)
    n_j = pl.num_programs(1)

    T = img_ref.shape[0]          # square tiles: T_r == T_c == T
    neg_big = jnp.float32(_NEG_BIG)

    # ---- zero the global accumulators on the very first grid step ----------
    @pl.when((i == 0) & (j == 0))
    def _():
        rowacc_ref[...] = jnp.zeros_like(rowacc_ref)
        colacc_ref[...] = jnp.zeros_like(colacc_ref)
        diagacc_ref[...] = jnp.zeros_like(diagacc_ref)

    # ---- logits tile [T, T]: one MXU matmul, f32 accumulation ---------------
    # Normalization, 1/temperature and the matmul-dtype cast were all done once
    # in the wrapper, so the kernel touches each element exactly once.
    logits = jax.lax.dot_general(
        img_ref[...], txt_ref[...],
        dimension_numbers=(((1,), (1,)), ((), ())),   # contract last dims (NT)
        preferred_element_type=jnp.float32)

    # ---- validity masks for batch padding (statically compiled away when the
    #      batch is a multiple of the tile edge) ------------------------------
    if masked:
        row_valid = (i * T
                     + jax.lax.broadcasted_iota(jnp.int32, (T, 1), 0)) < batch
        col_valid = (j * T
                     + jax.lax.broadcasted_iota(jnp.int32, (1, T), 1)) < batch
        logits_r = jnp.where(col_valid, logits, neg_big)   # for row-wise lse
        logits_c = jnp.where(row_valid, logits, neg_big)   # for col-wise lse
    else:
        logits_r = logits
        logits_c = logits

    # ---- diagonal logits: extracted from the i == j tile (same precision path
    #      as the LSEs, no extra input stream, no extra normalization) --------
    @pl.when(i == j)
    def _():
        dmask = (jax.lax.broadcasted_iota(jnp.int32, (T, T), 0)
                 == jax.lax.broadcasted_iota(jnp.int32, (T, T), 1))
        diag = jnp.sum(jnp.where(dmask, logits, 0.0), axis=1, keepdims=True)
        if masked:
            # padded rows are all-zero so their diag is already 0; keep the
            # guard for robustness (one (T,1) select once per row tile).
            diag = jnp.where(row_valid, diag, 0.0)
        diagacc_ref[...] += jnp.sum(diag, keepdims=True)

    # ---- row-wise online logsumexp ------------------------------------------
    @pl.when(j == 0)
    def _():
        rmax_ref[...] = jnp.full_like(rmax_ref, neg_big)
        rsum_ref[...] = jnp.zeros_like(rsum_ref)

    r_old = rmax_ref[...]
    r_new = jnp.maximum(r_old, jnp.max(logits_r, axis=1, keepdims=True))
    rsum_ref[...] = (rsum_ref[...] * jnp.exp(r_old - r_new)
                     + jnp.sum(jnp.exp(logits_r - r_new), axis=1, keepdims=True))
    rmax_ref[...] = r_new

    @pl.when(j == n_j - 1)
    def _():
        lse_row = rmax_ref[...] + jnp.log(rsum_ref[...])             # [T, 1]
        if masked:
            lse_row = jnp.where(row_valid, lse_row, 0.0)
        rowacc_ref[...] += jnp.sum(lse_row, keepdims=True)

    # ---- column-wise online logsumexp (persists across row tiles) -----------
    @pl.when(i == 0)
    def _():
        cmax_ref[j] = jnp.full((1, T), neg_big, jnp.float32)
        csum_ref[j] = jnp.zeros((1, T), jnp.float32)

    c_old = cmax_ref[j]
    c_new = jnp.maximum(c_old, jnp.max(logits_c, axis=0, keepdims=True))
    csum_ref[j] = (csum_ref[j] * jnp.exp(c_old - c_new)
                   + jnp.sum(jnp.exp(logits_c - c_new), axis=0, keepdims=True))
    cmax_ref[j] = c_new

    @pl.when(i == n_i - 1)
    def _():
        lse_col = cmax_ref[j] + jnp.log(csum_ref[j])                 # [1, T]
        if masked:
            lse_col = jnp.where(col_valid, lse_col, 0.0)
        colacc_ref[...] += jnp.sum(lse_col, keepdims=True)

    # ---- final combine:  loss = (sum lse_row + sum lse_col - 2*sum diag)/(2B)
    @pl.when((i == n_i - 1) & (j == n_j - 1))
    def _():
        total = rowacc_ref[...] + colacc_ref[...] - 2.0 * diagacc_ref[...]
        out_ref[...] = total * jnp.float32(0.5 / batch)


def _round_up(x, m):
    return (x + m - 1) // m * m


def contrastive_loss(image_embeds, text_embeds, temperature, *,
                     block_b=512, matmul_dtype=jnp.bfloat16,
                     vmem_limit_bytes=48 * 1024 * 1024):
    """CLIP symmetric InfoNCE loss.

    image_embeds, text_embeds: [batch, embed_dim]; temperature: scalar param.

    block_b: logits tile edge.  Per-generation guidance (with bf16 streaming):
             v6e 768-1024 (raise vmem_limit_bytes to ~96 MiB), v7x 512 (keep
             the limit <= ~48 MiB — only 64 MiB physical VMEM), v5e 384-512.
    matmul_dtype: MXU operand dtype (accumulation is always f32).  Use
             jnp.float32 if the learnable temperature drifts very small and the
             bf16 relative logit error matters.
    """
    B, D = image_embeds.shape
    assert text_embeds.shape == (B, D)

    # ---- hoisted preprocessing: normalize, fold 1/temperature, cast ---------
    # Done once per input in plain XLA, so the kernel never re-normalizes or
    # re-casts a tile.
    inv_temp = jnp.float32(1.0) / jnp.asarray(temperature, jnp.float32)
    img = (_l2_normalize(image_embeds.astype(jnp.float32))
           * inv_temp).astype(matmul_dtype)
    txt = _l2_normalize(text_embeds.astype(jnp.float32)).astype(matmul_dtype)

    # ---- tiling ---------------------------------------------------------------
    block_b = max(8, _round_up(int(block_b), 8))
    T = min(block_b, _round_up(B, 8))           # tile edge (multiple of 8)
    Bp = _round_up(B, T)                        # padded batch
    n_tiles = Bp // T
    masked = Bp != B                            # static flag

    if masked:
        pad = ((0, Bp - B), (0, 0))
        img = jnp.pad(img, pad)                 # padded rows are all-zero
        txt = jnp.pad(txt, pad)

    kernel = functools.partial(_contrastive_loss_kernel, batch=B, masked=masked)

    grid_spec = pltpu.PrefetchScalarGridSpec(
        num_scalar_prefetch=0,
        grid=(n_tiles, n_tiles),                # (row tiles, col tiles); col last
        in_specs=[
            pl.BlockSpec((T, D), lambda i, j: (i, 0)),   # image rows (tile i)
            pl.BlockSpec((T, D), lambda i, j: (j, 0)),   # text rows  (tile j)
        ],
        out_specs=pl.BlockSpec((1, 1), lambda i, j: (0, 0)),
        scratch_shapes=[
            pltpu.VMEM((n_tiles, 1, T), jnp.float32),   # column running max
            pltpu.VMEM((n_tiles, 1, T), jnp.float32),   # column running sum(exp)
            pltpu.VMEM((T, 1), jnp.float32),            # row running max
            pltpu.VMEM((T, 1), jnp.float32),            # row running sum(exp)
            pltpu.VMEM((1, 1), jnp.float32),            # sum of row logsumexp
            pltpu.VMEM((1, 1), jnp.float32),            # sum of col logsumexp
            pltpu.VMEM((1, 1), jnp.float32),            # sum of diagonal logits
        ],
    )

    out = pl.pallas_call(
        kernel,
        grid_spec=grid_spec,
        out_shape=jax.ShapeDtypeStruct((1, 1), jnp.float32),
        # Both axes carry state (column stats + scalar accumulators span row
        # tiles) so they must remain sequential ("arbitrary").
        # TODO(synk): v7x 2-TC split of the row axis (per-core partial stats +
        # logsumexp-merge epilogue) for a further ~2x once compute-bound.
        compiler_params=pltpu.CompilerParams(
            dimension_semantics=("arbitrary", "arbitrary"),
            vmem_limit_bytes=vmem_limit_bytes),
    )(img, txt)
    return out[0, 0]


def _reference_loss(image_embeds, text_embeds, temperature):
    # pure-JAX reference mirroring the PyTorch module
    eps = 1e-12
    img = image_embeds.astype(jnp.float32)
    txt = text_embeds.astype(jnp.float32)
    img = img / jnp.maximum(jnp.linalg.norm(img, axis=1, keepdims=True), eps)
    txt = txt / jnp.maximum(jnp.linalg.norm(txt, axis=1, keepdims=True), eps)
    logits = img @ txt.T / temperature
    B = logits.shape[0]
    lbl = jnp.arange(B)
    log_p_row = logits - jax.scipy.special.logsumexp(logits, axis=1, keepdims=True)
    log_p_col = logits - jax.scipy.special.logsumexp(logits, axis=0, keepdims=True)
    l_i2t = -jnp.mean(log_p_row[lbl, lbl])
    l_t2i = -jnp.mean(log_p_col[lbl, lbl])
    return 0.5 * (l_i2t + l_t2i)


if __name__ == "__main__":
    init_temperature = jnp.float32(0.07)   # module __init__ default
    key = jax.random.PRNGKey(0)

    # Case 1: module-sized input, default config (bf16 MXU operands, one tile).
    B, D = 8, 32
    k1, k2 = jax.random.split(key)
    img = jax.random.normal(k1, (B, D), jnp.float32)
    txt = jax.random.normal(k2, (B, D), jnp.float32)
    loss = jax.block_until_ready(contrastive_loss(img, txt, init_temperature))
    ref = _reference_loss(img, txt, init_temperature)
    assert jnp.allclose(loss, ref, rtol=3e-2, atol=3e-2), (loss, ref)

    # Case 2: same input, f32 MXU path — tight agreement with the reference.
    loss32 = jax.block_until_ready(
        contrastive_loss(img, txt, init_temperature, matmul_dtype=jnp.float32))
    assert jnp.allclose(loss32, ref, rtol=2e-4, atol=2e-4), (loss32, ref)

    # Case 3: multi-tile grid with batch padding (exercises the online
    # two-sided logsumexp, the i == j diagonal extraction and the padded
    # row/column masking).
    B2 = 23
    k3, k4 = jax.random.split(k2)
    img2 = jax.random.normal(k3, (B2, D), jnp.float32)
    txt2 = jax.random.normal(k4, (B2, D), jnp.float32)
    loss2 = jax.block_until_ready(
        contrastive_loss(img2, txt2, init_temperature,
                         block_b=8, matmul_dtype=jnp.float32))
    ref2 = _reference_loss(img2, txt2, init_temperature)
    assert jnp.allclose(loss2, ref2, rtol=2e-4, atol=2e-4), (loss2, ref2)

    # Case 4: multi-tile grid, no padding (masked path statically disabled).
    B3 = 32
    k5, k6 = jax.random.split(k4)
    img3 = jax.random.normal(k5, (B3, D), jnp.float32)
    txt3 = jax.random.normal(k6, (B3, D), jnp.float32)
    loss3 = jax.block_until_ready(
        contrastive_loss(img3, txt3, init_temperature,
                         block_b=8, matmul_dtype=jnp.float32))
    ref3 = _reference_loss(img3, txt3, init_temperature)
    assert jnp.allclose(loss3, ref3, rtol=2e-4, atol=2e-4), (loss3, ref3)

    print("KERNEL_OK")
</pallas_src>

<mosaic_0001>
module attributes {stable_mosaic.version = 11 : i64} {
  func.func @_contrastive_loss_kernel(%arg0: i32, %arg1: i32, %arg2: memref<8x32xbf16, #tpu.memory_space<vmem>>, %arg3: memref<8x32xbf16, #tpu.memory_space<vmem>>, %arg4: memref<1x1xf32, #tpu.memory_space<vmem>>, %arg5: memref<1x1x8xf32, #tpu.memory_space<vmem>>, %arg6: memref<1x1x8xf32, #tpu.memory_space<vmem>>, %arg7: memref<8x1xf32, #tpu.memory_space<vmem>>, %arg8: memref<8x1xf32, #tpu.memory_space<vmem>>, %arg9: memref<1x1xf32, #tpu.memory_space<vmem>>, %arg10: memref<1x1xf32, #tpu.memory_space<vmem>>, %arg11: memref<1x1xf32, #tpu.memory_space<vmem>>) attributes {dimension_semantics = [#tpu.dimension_semantics<arbitrary>, #tpu.dimension_semantics<arbitrary>], iteration_bounds = array<i64: 1, 1>, scalar_prefetch = 0 : i64, scratch_operands = 7 : i64, tpu.core_type = #tpu.core_type<tc>, window_params = [{transform_indices = @transform_0, window_bounds = array<i64: 8, 32>}, {transform_indices = @transform_1, window_bounds = array<i64: 8, 32>}, {pipeline_mode = #tpu.pipeline_mode<synchronous>, transform_indices = @transform_2, window_bounds = array<i64: 1, 1>}]} {
    %c0_i32 = arith.constant 0 : i32
    %0 = arith.cmpi eq, %arg0, %c0_i32 : i32
    %c0_i32_0 = arith.constant 0 : i32
    %1 = arith.cmpi eq, %arg1, %c0_i32_0 : i32
    %2 = arith.andi %0, %1 : i1
    %3 = arith.extui %2 : i1 to i32
    %c0_i32_1 = arith.constant 0 : i32
    %4 = arith.cmpi ne, %3, %c0_i32_1 : i32
    scf.if %4 {
      %cst_39 = arith.constant 0.000000e+00 : f32
      %70 = vector.broadcast %cst_39 : f32 to vector<1x1xf32>
      %c0_40 = arith.constant 0 : index
      %c0_41 = arith.constant 0 : index
      %71 = vector.load %arg9[%c0_40, %c0_41] : memref<1x1xf32, #tpu.memory_space<vmem>>, vector<1x1xf32>
      tpu.vector_store %arg9[%c0_40, %c0_41], %70 {strides = array<i32>} : memref<1x1xf32, #tpu.memory_space<vmem>>, vector<1x1xf32>,
      %cst_42 = arith.constant 0.000000e+00 : f32
      %72 = vector.broadcast %cst_42 : f32 to vector<1x1xf32>
      %c0_43 = arith.constant 0 : index
      %c0_44 = arith.constant 0 : index
      %73 = vector.load %arg10[%c0_43, %c0_44] : memref<1x1xf32, #tpu.memory_space<vmem>>, vector<1x1xf32>
      tpu.vector_store %arg10[%c0_43, %c0_44], %72 {strides = array<i32>} : memref<1x1xf32, #tpu.memory_space<vmem>>, vector<1x1xf32>,
      %cst_45 = arith.constant 0.000000e+00 : f32
      %74 = vector.broadcast %cst_45 : f32 to vector<1x1xf32>
      %c0_46 = arith.constant 0 : index
      %c0_47 = arith.constant 0 : index
      %75 = vector.load %arg11[%c0_46, %c0_47] : memref<1x1xf32, #tpu.memory_space<vmem>>, vector<1x1xf32>
      tpu.vector_store %arg11[%c0_46, %c0_47], %74 {strides = array<i32>} : memref<1x1xf32, #tpu.memory_space<vmem>>, vector<1x1xf32>,
    } else {
    }
    %c0 = arith.constant 0 : index
    %c0_2 = arith.constant 0 : index
    %5 = vector.load %arg2[%c0, %c0_2] : memref<8x32xbf16, #tpu.memory_space<vmem>>, vector<8x32xbf16>
    %c0_3 = arith.constant 0 : index
    %c0_4 = arith.constant 0 : index
    %6 = vector.load %arg3[%c0_3, %c0_4] : memref<8x32xbf16, #tpu.memory_space<vmem>>, vector<8x32xbf16>
    %cst = arith.constant dense<0.000000e+00> : vector<8x8xf32>
    %7 = tpu.matmul %5, %6, %cst {dimension_numbers = #tpu.dot_dimension_numbers<[1], [1], [0], [0], [0, 0, 1, 0], [], []>} : vector<8x32xbf16>, vector<8x32xbf16>, vector<8x8xf32> -> vector<8x8xf32>
    %8 = arith.cmpi eq, %arg0, %arg1 : i32
    %9 = arith.extui %8 : i1 to i32
    %c0_i32_5 = arith.constant 0 : i32
    %10 = arith.cmpi ne, %9, %c0_i32_5 : i32
    scf.if %10 {
      %70 = tpu.iota {dimensions = array<i32: 0>} : vector<8x8xi32>
      %71 = tpu.iota {dimensions = array<i32: 1>} : vector<8x8xi32>
      %72 = arith.cmpi eq, %70, %71 : vector<8x8xi32>
      %cst_39 = arith.constant 0.000000e+00 : f32
      %73 = vector.broadcast %cst_39 : f32 to vector<8x8xf32>
      %74 = arith.select %72, %7, %73 : vector<8x8xi1>, vector<8x8xf32>
      %cst_40 = arith.constant dense<0.000000e+00> : vector<8xf32>
      %75 = vector.multi_reduction <add>, %74, %cst_40 [1] : vector<8x8xf32> to vector<8xf32>
      %76 = vector.shape_cast %75 : vector<8xf32> to vector<8x1xf32>
      %c0_41 = arith.constant 0 : index
      %c0_42 = arith.constant 0 : index
      %77 = vector.load %arg11[%c0_41, %c0_42] : memref<1x1xf32, #tpu.memory_space<vmem>>, vector<1x1xf32>
      %78 = vector.shape_cast %76 : vector<8x1xf32> to vector<1x8x1xf32>
      %cst_43 = arith.constant dense<0.000000e+00> : vector<1xf32>
      %79 = vector.multi_reduction <add>, %78, %cst_43 [1, 2] : vector<1x8x1xf32> to vector<1xf32>
      %80 = vector.shape_cast %79 : vector<1xf32> to vector<1x1x1xf32>
      %81 = vector.extract %80[0, 0, 0] : f32 from vector<1x1x1xf32>
      %82 = vector.broadcast %81 : f32 to vector<1x1xf32>
      %83 = arith.addf %77, %82 : vector<1x1xf32>
      %c0_44 = arith.constant 0 : index
      %c0_45 = arith.constant 0 : index
      %84 = vector.load %arg11[%c0_44, %c0_45] : memref<1x1xf32, #tpu.memory_space<vmem>>, vector<1x1xf32>
      tpu.vector_store %arg11[%c0_44, %c0_45], %83 {strides = array<i32>} : memref<1x1xf32, #tpu.memory_space<vmem>>, vector<1x1xf32>,
    } else {
    }
    %c0_i32_6 = arith.constant 0 : i32
    %11 = arith.cmpi eq, %arg1, %c0_i32_6 : i32
    %12 = arith.extui %11 : i1 to i32
    %cst_7 = arith.constant -1.000000e+30 : f32
    %c0_i32_8 = arith.constant 0 : i32
    %13 = arith.cmpi ne, %12, %c0_i32_8 : i32
    scf.if %13 {
      %70 = vector.broadcast %cst_7 : f32 to vector<8x1xf32>
      %c0_39 = arith.constant 0 : index
      %c0_40 = arith.constant 0 : index
      %71 = vector.load %arg7[%c0_39, %c0_40] : memref<8x1xf32, #tpu.memory_space<vmem>>, vector<8x1xf32>
      tpu.vector_store %arg7[%c0_39, %c0_40], %70 {strides = array<i32>} : memref<8x1xf32, #tpu.memory_space<vmem>>, vector<8x1xf32>,
      %cst_41 = arith.constant 0.000000e+00 : f32
      %72 = vector.broadcast %cst_41 : f32 to vector<8x1xf32>
      %c0_42 = arith.constant 0 : index
      %c0_43 = arith.constant 0 : index
      %73 = vector.load %arg8[%c0_42, %c0_43] : memref<8x1xf32, #tpu.memory_space<vmem>>, vector<8x1xf32>
      tpu.vector_store %arg8[%c0_42, %c0_43], %72 {strides = array<i32>} : memref<8x1xf32, #tpu.memory_space<vmem>>, vector<8x1xf32>,
    } else {
    }
    %c0_9 = arith.constant 0 : index
    %c0_10 = arith.constant 0 : index
    %14 = vector.load %arg7[%c0_9, %c0_10] : memref<8x1xf32, #tpu.memory_space<vmem>>, vector<8x1xf32>
    %cst_11 = arith.constant dense<0xFF800000> : vector<8xf32>
    %15 = vector.multi_reduction <maximumf>, %7, %cst_11 [1] : vector<8x8xf32> to vector<8xf32>
    %16 = vector.shape_cast %15 : vector<8xf32> to vector<8x1xf32>
    %17 = arith.maximumf %14, %16 : vector<8x1xf32>
    %c0_12 = arith.constant 0 : index
    %c0_13 = arith.constant 0 : index
    %18 = vector.load %arg8[%c0_12, %c0_13] : memref<8x1xf32, #tpu.memory_space<vmem>>, vector<8x1xf32>
    %19 = arith.subf %14, %17 : vector<8x1xf32>
    %20 = math.exp %19 : vector<8x1xf32>
    %21 = arith.mulf %18, %20 : vector<8x1xf32>
    %22 = vector.broadcast %17 : vector<8x1xf32> to vector<8x8xf32>
    %23 = arith.subf %7, %22 : vector<8x8xf32>
    %24 = math.exp %23 : vector<8x8xf32>
    %cst_14 = arith.constant dense<0.000000e+00> : vector<8xf32>
    %25 = vector.multi_reduction <add>, %24, %cst_14 [1] : vector<8x8xf32> to vector<8xf32>
    %26 = vector.shape_cast %25 : vector<8xf32> to vector<8x1xf32>
    %27 = arith.addf %21, %26 : vector<8x1xf32>
    %c0_15 = arith.constant 0 : index
    %c0_16 = arith.constant 0 : index
    %28 = vector.load %arg8[%c0_15, %c0_16] : memref<8x1xf32, #tpu.memory_space<vmem>>, vector<8x1xf32>
    tpu.vector_store %arg8[%c0_15, %c0_16], %27 {strides = array<i32>} : memref<8x1xf32, #tpu.memory_space<vmem>>, vector<8x1xf32>,
    %c0_17 = arith.constant 0 : index
    %c0_18 = arith.constant 0 : index
    %29 = vector.load %arg7[%c0_17, %c0_18] : memref<8x1xf32, #tpu.memory_space<vmem>>, vector<8x1xf32>
    tpu.vector_store %arg7[%c0_17, %c0_18], %17 {strides = array<i32>} : memref<8x1xf32, #tpu.memory_space<vmem>>, vector<8x1xf32>,
    %c0_i32_19 = arith.constant 0 : i32
    %30 = arith.cmpi eq, %arg1, %c0_i32_19 : i32
    %31 = arith.extui %30 : i1 to i32
    %c0_i32_20 = arith.constant 0 : i32
    %32 = arith.cmpi ne, %31, %c0_i32_20 : i32
    scf.if %32 {
      %c0_39 = arith.constant 0 : index
      %c0_40 = arith.constant 0 : index
      %70 = vector.load %arg7[%c0_39, %c0_40] : memref<8x1xf32, #tpu.memory_space<vmem>>, vector<8x1xf32>
      %c0_41 = arith.constant 0 : index
      %c0_42 = arith.constant 0 : index
      %71 = vector.load %arg8[%c0_41, %c0_42] : memref<8x1xf32, #tpu.memory_space<vmem>>, vector<8x1xf32>
      %72 = math.log %71 : vector<8x1xf32>
      %73 = arith.addf %70, %72 : vector<8x1xf32>
      %c0_43 = arith.constant 0 : index
      %c0_44 = arith.constant 0 : index
      %74 = vector.load %arg9[%c0_43, %c0_44] : memref<1x1xf32, #tpu.memory_space<vmem>>, vector<1x1xf32>
      %75 = vector.shape_cast %73 : vector<8x1xf32> to vector<1x8x1xf32>
      %cst_45 = arith.constant dense<0.000000e+00> : vector<1xf32>
      %76 = vector.multi_reduction <add>, %75, %cst_45 [1, 2] : vector<1x8x1xf32> to vector<1xf32>
      %77 = vector.shape_cast %76 : vector<1xf32> to vector<1x1x1xf32>
      %78 = vector.extract %77[0, 0, 0] : f32 from vector<1x1x1xf32>
      %79 = vector.broadcast %78 : f32 to vector<1x1xf32>
      %80 = arith.addf %74, %79 : vector<1x1xf32>
      %c0_46 = arith.constant 0 : index
      %c0_47 = arith.constant 0 : index
      %81 = vector.load %arg9[%c0_46, %c0_47] : memref<1x1xf32, #tpu.memory_space<vmem>>, vector<1x1xf32>
      tpu.vector_store %arg9[%c0_46, %c0_47], %80 {strides = array<i32>} : memref<1x1xf32, #tpu.memory_space<vmem>>, vector<1x1xf32>,
    } else {
    }
    %c0_i32_21 = arith.constant 0 : i32
    %33 = arith.cmpi eq, %arg0, %c0_i32_21 : i32
    %34 = arith.extui %33 : i1 to i32
    %cst_22 = arith.constant -1.000000e+30 : f32
    %c0_i32_23 = arith.constant 0 : i32
    %35 = arith.cmpi ne, %34, %c0_i32_23 : i32
    scf.if %35 {
      %70 = vector.broadcast %cst_22 : f32 to vector<1x8xf32>
      %71 = arith.index_cast %arg1 : i32 to index
      %c0_39 = arith.constant 0 : index
      %c0_40 = arith.constant 0 : index
      %72 = vector.load %arg5[%71, %c0_39, %c0_40] : memref<1x1x8xf32, #tpu.memory_space<vmem>>, vector<1x1x8xf32>
      %73 = vector.shape_cast %72 : vector<1x1x8xf32> to vector<1x8xf32>
      %74 = vector.shape_cast %70 : vector<1x8xf32> to vector<1x1x8xf32>
      tpu.vector_store %arg5[%71, %c0_39, %c0_40], %74 {strides = array<i32>} : memref<1x1x8xf32, #tpu.memory_space<vmem>>, vector<1x1x8xf32>,
      %cst_41 = arith.constant 0.000000e+00 : f32
      %75 = vector.broadcast %cst_41 : f32 to vector<1x8xf32>
      %76 = arith.index_cast %arg1 : i32 to index
      %c0_42 = arith.constant 0 : index
      %c0_43 = arith.constant 0 : index
      %77 = vector.load %arg6[%76, %c0_42, %c0_43] : memref<1x1x8xf32, #tpu.memory_space<vmem>>, vector<1x1x8xf32>
      %78 = vector.shape_cast %77 : vector<1x1x8xf32> to vector<1x8xf32>
      %79 = vector.shape_cast %75 : vector<1x8xf32> to vector<1x1x8xf32>
      tpu.vector_store %arg6[%76, %c0_42, %c0_43], %79 {strides = array<i32>} : memref<1x1x8xf32, #tpu.memory_space<vmem>>, vector<1x1x8xf32>,
    } else {
    }
    %36 = arith.index_cast %arg1 : i32 to index
    %c0_24 = arith.constant 0 : index
    %c0_25 = arith.constant 0 : index
    %37 = vector.load %arg5[%36, %c0_24, %c0_25] : memref<1x1x8xf32, #tpu.memory_space<vmem>>, vector<1x1x8xf32>
    %38 = vector.shape_cast %37 : vector<1x1x8xf32> to vector<1x8xf32>
    %cst_26 = arith.constant dense<0xFF800000> : vector<8xf32>
    %39 = vector.multi_reduction <maximumf>, %7, %cst_26 [0] : vector<8x8xf32> to vector<8xf32>
    %40 = vector.shape_cast %39 : vector<8xf32> to vector<1x8xf32>
    %41 = arith.maximumf %38, %40 : vector<1x8xf32>
    %42 = arith.index_cast %arg1 : i32 to index
    %c0_27 = arith.constant 0 : index
    %c0_28 = arith.constant 0 : index
    %43 = vector.load %arg6[%42, %c0_27, %c0_28] : memref<1x1x8xf32, #tpu.memory_space<vmem>>, vector<1x1x8xf32>
    %44 = vector.shape_cast %43 : vector<1x1x8xf32> to vector<1x8xf32>
    %45 = arith.subf %38, %41 : vector<1x8xf32>
    %46 = math.exp %45 : vector<1x8xf32>
    %47 = arith.mulf %44, %46 : vector<1x8xf32>
    %48 = vector.broadcast %41 : vector<1x8xf32> to vector<8x8xf32>
    %49 = arith.subf %7, %48 : vector<8x8xf32>
    %50 = math.exp %49 : vector<8x8xf32>
    %cst_29 = arith.constant dense<0.000000e+00> : vector<8xf32>
    %51 = vector.multi_reduction <add>, %50, %cst_29 [0] : vector<8x8xf32> to vector<8xf32>
    %52 = vector.shape_cast %51 : vector<8xf32> to vector<1x8xf32>
    %53 = arith.addf %47, %52 : vector<1x8xf32>
    %54 = arith.index_cast %arg1 : i32 to index
    %c0_30 = arith.constant 0 : index
    %c0_31 = arith.constant 0 : index
    %55 = vector.load %arg6[%54, %c0_30, %c0_31] : memref<1x1x8xf32, #tpu.memory_space<vmem>>, vector<1x1x8xf32>
    %56 = vector.shape_cast %55 : vector<1x1x8xf32> to vector<1x8xf32>
    %57 = vector.shape_cast %53 : vector<1x8xf32> to vector<1x1x8xf32>
    tpu.vector_store %arg6[%54, %c0_30, %c0_31], %57 {strides = array<i32>} : memref<1x1x8xf32, #tpu.memory_space<vmem>>, vector<1x1x8xf32>,
    %58 = arith.index_cast %arg1 : i32 to index
    %c0_32 = arith.constant 0 : index
    %c0_33 = arith.constant 0 : index
    %59 = vector.load %arg5[%58, %c0_32, %c0_33] : memref<1x1x8xf32, #tpu.memory_space<vmem>>, vector<1x1x8xf32>
    %60 = vector.shape_cast %59 : vector<1x1x8xf32> to vector<1x8xf32>
    %61 = vector.shape_cast %41 : vector<1x8xf32> to vector<1x1x8xf32>
    tpu.vector_store %arg5[%58, %c0_32, %c0_33], %61 {strides = array<i32>} : memref<1x1x8xf32, #tpu.memory_space<vmem>>, vector<1x1x8xf32>,
    %c0_i32_34 = arith.constant 0 : i32
    %62 = arith.cmpi eq, %arg0, %c0_i32_34 : i32
    %63 = arith.extui %62 : i1 to i32
    %c0_i32_35 = arith.constant 0 : i32
    %64 = arith.cmpi ne, %63, %c0_i32_35 : i32
    scf.if %64 {
      %70 = arith.index_cast %arg1 : i32 to index
      %c0_39 = arith.constant 0 : index
      %c0_40 = arith.constant 0 : index
      %71 = vector.load %arg5[%70, %c0_39, %c0_40] : memref<1x1x8xf32, #tpu.memory_space<vmem>>, vector<1x1x8xf32>
      %72 = vector.shape_cast %71 : vector<1x1x8xf32> to vector<1x8xf32>
      %73 = arith.index_cast %arg1 : i32 to index
      %c0_41 = arith.constant 0 : index
      %c0_42 = arith.constant 0 : index
      %74 = vector.load %arg6[%73, %c0_41, %c0_42] : memref<1x1x8xf32, #tpu.memory_space<vmem>>, vector<1x1x8xf32>
      %75 = vector.shape_cast %74 : vector<1x1x8xf32> to vector<1x8xf32>
      %76 = math.log %75 : vector<1x8xf32>
      %77 = arith.addf %72, %76 : vector<1x8xf32>
      %c0_43 = arith.constant 0 : index
      %c0_44 = arith.constant 0 : index
      %78 = vector.load %arg10[%c0_43, %c0_44] : memref<1x1xf32, #tpu.memory_space<vmem>>, vector<1x1xf32>
      %79 = vector.shape_cast %77 : vector<1x8xf32> to vector<1x1x8xf32>
      %cst_45 = arith.constant dense<0.000000e+00> : vector<1xf32>
      %80 = vector.multi_reduction <add>, %79, %cst_45 [1, 2] : vector<1x1x8xf32> to vector<1xf32>
      %81 = vector.shape_cast %80 : vector<1xf32> to vector<1x1x1xf32>
      %82 = vector.extract %81[0, 0, 0] : f32 from vector<1x1x1xf32>
      %83 = vector.broadcast %82 : f32 to vector<1x1xf32>
      %84 = arith.addf %78, %83 : vector<1x1xf32>
      %c0_46 = arith.constant 0 : index
      %c0_47 = arith.constant 0 : index
      %85 = vector.load %arg10[%c0_46, %c0_47] : memref<1x1xf32, #tpu.memory_space<vmem>>, vector<1x1xf32>
      tpu.vector_store %arg10[%c0_46, %c0_47], %84 {strides = array<i32>} : memref<1x1xf32, #tpu.memory_space<vmem>>, vector<1x1xf32>,
    } else {
    }
    %c0_i32_36 = arith.constant 0 : i32
    %65 = arith.cmpi eq, %arg0, %c0_i32_36 : i32
    %c0_i32_37 = arith.constant 0 : i32
    %66 = arith.cmpi eq, %arg1, %c0_i32_37 : i32
    %67 = arith.andi %65, %66 : i1
    %68 = arith.extui %67 : i1 to i32
    %c0_i32_38 = arith.constant 0 : i32
    %69 = arith.cmpi ne, %68, %c0_i32_38 : i32
    scf.if %69 {
      %c0_39 = arith.constant 0 : index
      %c0_40 = arith.constant 0 : index
      %70 = vector.load %arg9[%c0_39, %c0_40] : memref<1x1xf32, #tpu.memory_space<vmem>>, vector<1x1xf32>
      %c0_41 = arith.constant 0 : index
      %c0_42 = arith.constant 0 : index
      %71 = vector.load %arg10[%c0_41, %c0_42] : memref<1x1xf32, #tpu.memory_space<vmem>>, vector<1x1xf32>
      %72 = arith.addf %70, %71 : vector<1x1xf32>
      %c0_43 = arith.constant 0 : index
      %c0_44 = arith.constant 0 : index
      %73 = vector.load %arg11[%c0_43, %c0_44] : memref<1x1xf32, #tpu.memory_space<vmem>>, vector<1x1xf32>
      %cst_45 = arith.constant 2.000000e+00 : f32
      %74 = vector.broadcast %cst_45 : f32 to vector<1x1xf32>
      %75 = arith.mulf %74, %73 : vector<1x1xf32>
      %76 = arith.subf %72, %75 : vector<1x1xf32>
      %cst_46 = arith.constant 6.250000e-02 : f32
      %77 = vector.broadcast %cst_46 : f32 to vector<1x1xf32>
      %78 = arith.mulf %76, %77 : vector<1x1xf32>
      %c0_47 = arith.constant 0 : index
      %c0_48 = arith.constant 0 : index
      %79 = vector.load %arg4[%c0_47, %c0_48] : memref<1x1xf32, #tpu.memory_space<vmem>>, vector<1x1xf32>
      tpu.vector_store %arg4[%c0_47, %c0_48], %78 {strides = array<i32>} : memref<1x1xf32, #tpu.memory_space<vmem>>, vector<1x1xf32>,
    } else {
    }
    return
  }
  func.func @transform_0(%arg0: i32, %arg1: i32) -> (i32, i32) {
    %c0_i32 = arith.constant 0 : i32
    %c0_i32_0 = arith.constant 0 : i32
    return %arg0, %c0_i32 : i32, i32
  }
  func.func @transform_1(%arg0: i32, %arg1: i32) -> (i32, i32) {
    %c0_i32 = arith.constant 0 : i32
    %c0_i32_0 = arith.constant 0 : i32
    return %arg1, %c0_i32 : i32, i32
  }
  func.func @transform_2(%arg0: i32, %arg1: i32) -> (i32, i32) {
    %c0_i32 = arith.constant 0 : i32
    %c0_i32_0 = arith.constant 0 : i32
    %c0_i32_1 = arith.constant 0 : i32
    return %c0_i32, %c0_i32_0 : i32, i32
  }
}

</mosaic_0001>

<llo_original>
// kernel: tpu_custom_call.1
$region0: #{tpu_custom_call.1}
  #allocation0 [shape = 'u32[]', space=smem, size = 0x4, offset = 0x4, fixed_abs, tag = 'smem constant byte address 0x4 - core index']
  #allocation1 [shape = 'u32[144,128]{1,0:T(1,128)}', space=vmem, size = 0x12000, scoped, tag = 'internal scratch']
  #allocation2 [shape = 'f32[1,1,8]{2,1,0:T(1,128)}', space=vmem, size = 0x200, scoped, tag = 'scratch operand']
  #allocation3 [shape = 'f32[1,1,8]{2,1,0:T(1,128)}', space=vmem, size = 0x200, scoped, tag = 'scratch operand']
  #allocation4 [shape = 'f32[8,1]{1,0:T(8,128)}', space=vmem, size = 0x1000, scoped, tag = 'scratch operand']
  #allocation5 [shape = 'f32[8,1]{1,0:T(8,128)}', space=vmem, size = 0x1000, scoped, tag = 'scratch operand']
  #allocation6 [shape = 'f32[1,1]{1,0:T(1,128)}', space=vmem, size = 0x200, scoped, tag = 'scratch operand']
  #allocation7 [shape = 'f32[1,1]{1,0:T(1,128)}', space=vmem, size = 0x200, scoped, tag = 'scratch operand']
  #allocation8 [shape = 'f32[1,1]{1,0:T(1,128)}', space=vmem, size = 0x200, scoped, tag = 'scratch operand']
  %s0 = inlined_call_operand.hbm [shape: bf16[8,32], index: 0, kind: input, shape index: {}]
  %s1 = inlined_call_operand.hbm [shape: bf16[8,32], index: 1, kind: input, shape index: {}]
  %s2 = inlined_call_operand.hbm [shape: f32[1,1], index: 2, kind: output, shape index: {}]
  %s3 = sld [smem:[#allocation0]]
  $region54: #{tpu_custom_call.1} parent=0
    _
  %s5 = ssub.s32 1, %s3
  %s6 = scalar_select 0, %s5, %s3
  $region1: #{tpu_custom_call.1} parent=0
    #allocation9 [shape = 'u8[2048]{0}', space=vmem, size = 0x800, scoped, tag = 'input window, operand 0, single buffered']
    #allocation10 [shape = 's32[1]{0}', space=sflag, size = 0x4, scoped, tag = 'scoped memory for tpu_custom_call.1']
    #allocation11 [shape = 's32[1]{0}', space=sflag, size = 0x4, scoped, tag = 'scoped memory for tpu_custom_call.1']
    #allocation12 [shape = 'u8[2048]{0}', space=vmem, size = 0x800, scoped, tag = 'input window, operand 1, single buffered']
    #allocation13 [shape = 's32[1]{0}', space=sflag, size = 0x4, scoped, tag = 'scoped memory for tpu_custom_call.1']
    #allocation14 [shape = 'u8[512]{0}', space=vmem, size = 0x400, scoped, tag = 'output window, operand 0, single buffered']
    %7 = vsyncpa [#allocation10], 0
    %8 = vsyncpa [#allocation13], 0
    %9 = vsyncpa [#allocation11], 0
    // Predicated region
    $region2: #{tpu_custom_call.1} parent=1 // pred_check
      _
    $region3: #{tpu_custom_call.1} parent=1 // pred_check_branch
      %11 = sbr.rel (0) target = $region5
    $region4: #{tpu_custom_call.1} parent=1 // pred_region
      %s13 = ssub.s32 64, 64
      %14 = vsyncadd [#allocation10], %s13
      %s16 = sshll.u32 [#allocation9], 4
      %s17 = int_to_ptr.vmem [resolvable:$true] %s16
      %19 = dma.hbm_to_vmem [thread:$0]  %s0, 64, %s17, [#allocation10]
    $region5: #{tpu_custom_call.1} parent=1 // pred_fallthru
      _
    // Predicated region
    $region6: #{tpu_custom_call.1} parent=1 // pred_check
      _
    $region7: #{tpu_custom_call.1} parent=1 // pred_check_branch
      %21 = sbr.rel (0) target = $region9
    $region8: #{tpu_custom_call.1} parent=1 // pred_region
      %s23 = ssub.s32 64, 64
      %24 = vsyncadd [#allocation13], %s23
      %s26 = sshll.u32 [#allocation12], 4
      %s27 = int_to_ptr.vmem [resolvable:$true] %s26
      %29 = dma.hbm_to_vmem [thread:$0]  %s1, 64, %s27, [#allocation13]
    $region9: #{tpu_custom_call.1} parent=1 // pred_fallthru
      _
    // Predicated region
    $region10: #{tpu_custom_call.1} parent=1 // pred_check
      _
    $region11: #{tpu_custom_call.1} parent=1 // pred_check_branch
      %31 = sbr.rel (0) target = $region13
    $region12: #{tpu_custom_call.1} parent=1 // pred_region
      %32 = dma.done [#allocation10], 64
    $region13: #{tpu_custom_call.1} parent=1 // pred_fallthru
      _
    // Predicated region
    $region14: #{tpu_custom_call.1} parent=1 // pred_check
      _
    $region15: #{tpu_custom_call.1} parent=1 // pred_check_branch
      %34 = sbr.rel (0) target = $region17
    $region16: #{tpu_custom_call.1} parent=1 // pred_region
      %35 = dma.done [#allocation13], 64
    $region17: #{tpu_custom_call.1} parent=1 // pred_fallthru
      _
    %p37 = scmp.eq.s32.totalorder 0, 0
    %p38 = scmp.eq.s32.totalorder 0, 0
    %p39 = pnand %p37, %p38
    %p40 = pneg %p39
    // Predicated region
    $region18: #{tpu_custom_call.1} parent=1 // pred_check
      _
    $region19: #{tpu_custom_call.1} parent=1 // pred_check_branch
      %42 = sbr.rel (%p39) target = $region21
    $region20: #{tpu_custom_call.1} parent=1 // pred_region
      %vm43 = vcmask 0
      %44 = vst.msk [vmem:[#allocation6] sm:$0x1] %vm43, 0.0
      %45 = vst.msk [vmem:[#allocation7] sm:$0x1] %vm43, 0.0
      %46 = vst.msk [vmem:[#allocation8] sm:$0x1] %vm43, 0.0
    $region21: #{tpu_custom_call.1} parent=1 // pred_fallthru
      _
    %v47 = vld [vmem:[#allocation9] sm:$0xf]
    %v48 = vld [vmem:[#allocation12] sm:$0xf]
    %vm49 = vcmask 261120
    %v51 = vsel %vm49, %v47, 0
    %v54 = vsel %vm49, %v48, 0
    %56 = vmatprep.subr.bf16.mxu0 0
    %57 = vmatpush1.bf16.xpose.msra.mxu0 %v54
    %58 = vmatprep.subr.bf16.mxu0 0
    %59 = vmatpush1.bf16.xpose.msra.mxu0 0
    %60 = vmatprep.subr.bf16.mxu0 0
    %61 = vmatpush1.bf16.xpose.msra.mxu0 0
    %62 = vmatprep.subr.bf16.mxu0 0
    %63 = vmatpush1.bf16.xpose.msra.mxu0 0
    %64 = vmatprep.subr.bf16.mxu0 0
    %65 = vmatpush1.bf16.xpose.msra.mxu0 0
    %66 = vmatprep.subr.bf16.mxu0 0
    %67 = vmatpush1.bf16.xpose.msra.mxu0 0
    %68 = vmatprep.subr.bf16.mxu0 0
    %69 = vmatpush1.bf16.xpose.msra.mxu0 0
    %70 = vmatprep.subr.bf16.mxu0 0
    %71 = vmatpush1.bf16.xpose.msra.mxu0 0
    %72 = vmatprep.subr.bf16.mxu0 0
    %73 = vmatpush1.bf16.xpose.msra.mxu0 0
    %74 = vmatprep.subr.bf16.mxu0 0
    %75 = vmatpush1.bf16.xpose.msra.mxu0 0
    %76 = vmatprep.subr.bf16.mxu0 0
    %77 = vmatpush1.bf16.xpose.msra.mxu0 0
    %78 = vmatprep.subr.bf16.mxu0 0
    %79 = vmatpush1.bf16.xpose.msra.mxu0 0
    %80 = vmatprep.subr.bf16.mxu0 0
    %81 = vmatpush1.bf16.xpose.msra.mxu0 0
    %82 = vmatprep.subr.bf16.mxu0 0
    %83 = vmatpush1.bf16.xpose.msra.mxu0 0
    %84 = vmatprep.subr.bf16.mxu0 0
    %85 = vmatpush1.bf16.xpose.msra.mxu0 0
    %86 = vmatprep.subr.bf16.mxu0 0
    %87 = vmatpush1.bf16.xpose.msra.mxu0 0
    %88 = vmatprep.mubr.bf16.mxu0 0
    %89 = vmatmul.mubr.bf16.gmra.mrb[0].mxu0 %v51
    %v90 = vpop.f32.mrb[0].mxu0
    %v91 = vadd.f32 0.0, %v90
    %v92 = vpop.f32.mrb[0].mxu0
    %v93 = vpop.f32.mrb[0].mxu0
    %v94 = vpop.f32.mrb[0].mxu0
    %95 = vdwg.mxu0
    %p96 = scmp.eq.s32.totalorder 0, 0
    // Predicated region
    $region22: #{tpu_custom_call.1} parent=1 // pred_check
      %p97 = pneg %p96
    $region23: #{tpu_custom_call.1} parent=1 // pred_check_branch
      %99 = sbr.rel (%p97) target = $region25
    $region24: #{tpu_custom_call.1} parent=1 // pred_region
      %v100 = vlaneseq
      %v101 = vshrl.u32 %v100, 7
      %v102 = vlaneseq
      %v103 = vand.u32 %v102, 127
      %vm104 = vcmp.eq.s32.totalorder %v101, %v103
      %v105 = vsel %vm104, %v91, 0.0
      %vm106 = vcmask 64512
      %v107 = vsel %vm106, %v105, 0.0
      %108 = vadd.xlane.f32.xlu0 %v107
      %v109 = vpop.xlane.xlu0 %108
      %v110 = vld [vmem:[#allocation8] sm:$0x1]
      %vm111 = vcmask 7168
      %v112 = vsel %vm111, %v109, 0.0
      %113 = vadd.xlane.f32.xlu0 %v112
      %v114 = vpop.xlane.xlu0 %113
      %v115 = vrot.slane %v114, 4
      %v116 = vadd.f32 %v114, %v115
      %v117 = vrot.slane %v116, 2
      %v118 = vadd.f32 %v116, %v117
      %v119 = vrot.slane %v118, 1
      %v120 = vadd.f32 %v118, %v119
      %s121 = vtos %v120
      %v122 = vstv %s121
      %v123 = vadd.f32 %v110, %v122
      %vm124 = vcmask 0
      %125 = vst.msk [vmem:[#allocation8] sm:$0x1] %vm124, %v123
    $region25: #{tpu_custom_call.1} parent=1 // pred_fallthru
      _
    // Predicated region
    $region26: #{tpu_custom_call.1} parent=1 // pred_check
      %p126 = pneg %p38
    $region27: #{tpu_custom_call.1} parent=1 // pred_check_branch
      %128 = sbr.rel (%p126) target = $region29
    $region28: #{tpu_custom_call.1} parent=1 // pred_region
      %vm129 = vcmask 7168
      %130 = vst.msk [vmem:[#allocation4] sm:$0xff] %vm129, -1e+30
      %131 = vst.msk [vmem:[#allocation5] sm:$0xff] %vm129, 0.0
    $region29: #{tpu_custom_call.1} parent=1 // pred_fallthru
      _
    %v132 = vld [vmem:[#allocation4] sm:$0xff]
    %vm133 = vcmask 64512
    %v134 = vsel %vm133, %v91, -inf
    %135 = vmax.xlane.f32.xlu0 %v134
    %v136 = vpop.xlane.xlu0 %135
    %v137 = vmax.f32 %v132, %v136
    %v138 = vld [vmem:[#allocation5] sm:$0xff]
    %v139 = vsub.f32 %v132, %v137
    %v140 = vmul.f32 %v139, 1.442695
    %v141 = vpow.pop %v140
    %v142 = vmul.f32 %v138, %v141
    %144 = vset.pattern.permute.xlu0 0
    %145 = vperm.xlu0 %144, %v137
    %v146 = vpop.permute.xlu0 %145
    %v148 = vsub.f32 %v91, %v146
    %v149 = vmul.f32 %v148, 1.442695
    %v150 = vpow.pop %v149
    %v151 = vsel %vm133, %v150, 0.0
    %152 = vadd.xlane.f32.xlu0 %v151
    %v153 = vpop.xlane.xlu0 %152
    %v154 = vadd.f32 %v142, %v153
    %vm155 = vcmask 7168
    %156 = vst.msk [vmem:[#allocation5] sm:$0xff] %vm155, %v154
    %157 = vst.msk [vmem:[#allocation4] sm:$0xff] %vm155, %v137
    // Predicated region
    $region30: #{tpu_custom_call.1} parent=1 // pred_check
      %p158 = pneg %p38
    $region31: #{tpu_custom_call.1} parent=1 // pred_check_branch
      %160 = sbr.rel (%p158) target = $region33
    $region32: #{tpu_custom_call.1} parent=1 // pred_region
      %v161 = vld [vmem:[#allocation4] sm:$0xff]
      %v162 = vld [vmem:[#allocation5] sm:$0xff]
      %v163 = vlog2.pop %v162
      %v164 = vmul.f32 %v163, 0.6931472
      %v165 = vadd.f32 %v161, %v164
      %v166 = vld [vmem:[#allocation6] sm:$0x1]
      %v167 = vsel %vm155, %v165, 0.0
      %168 = vadd.xlane.f32.xlu0 %v167
      %v169 = vpop.xlane.xlu0 %168
      %v170 = vrot.slane %v169, 4
      %v171 = vadd.f32 %v169, %v170
      %v172 = vrot.slane %v171, 2
      %v173 = vadd.f32 %v171, %v172
      %v174 = vrot.slane %v173, 1
      %v175 = vadd.f32 %v173, %v174
      %s176 = vtos %v175
      %v177 = vstv %s176
      %v178 = vadd.f32 %v166, %v177
      %vm179 = vcmask 0
      %180 = vst.msk [vmem:[#allocation6] sm:$0x1] %vm179, %v178
    $region33: #{tpu_custom_call.1} parent=1 // pred_fallthru
      _
    // Predicated region
    $region34: #{tpu_custom_call.1} parent=1 // pred_check
      %p181 = pneg %p37
    $region35: #{tpu_custom_call.1} parent=1 // pred_check_branch
      %183 = sbr.rel (%p181) target = $region37
    $region36: #{tpu_custom_call.1} parent=1 // pred_region
      %vm184 = vcmask 57344
      %185 = vst.msk [vmem:[#allocation2] sm:$0x1] %vm184, -1e+30
      %186 = vst.msk [vmem:[#allocation3] sm:$0x1] %vm184, 0.0
    $region37: #{tpu_custom_call.1} parent=1 // pred_fallthru
      _
    %v187 = vld [vmem:[#allocation2] sm:$0x1]
    %v188 = vrot.slane %v134, 4
    %v189 = vmax.f32 %v134, %v188
    %v190 = vrot.slane %v189, 2
    %v191 = vmax.f32 %v189, %v190
    %v192 = vrot.slane %v191, 1
    %v193 = vmax.f32 %v191, %v192
    %v194 = vmax.f32 %v187, %v193
    %v195 = vld [vmem:[#allocation3] sm:$0x1]
    %v196 = vsub.f32 %v187, %v194
    %v197 = vmul.f32 %v196, 1.442695
    %v198 = vpow.pop %v197
    %v199 = vmul.f32 %v195, %v198
    %v201 = vlaneseq
    %v202 = vshrl.u32 %v201, 7
    %v203 = vsub.s32 0, %v202
    %v204 = vrot.slane %v194, %v203
    %v206 = vsub.f32 %v91, %v204
    %v207 = vmul.f32 %v206, 1.442695
    %v208 = vpow.pop %v207
    %v209 = vsel %vm133, %v208, 0.0
    %v210 = vrot.slane %v209, 4
    %v211 = vadd.f32 %v209, %v210
    %v212 = vrot.slane %v211, 2
    %v213 = vadd.f32 %v211, %v212
    %v214 = vrot.slane %v213, 1
    %v215 = vadd.f32 %v213, %v214
    %v216 = vadd.f32 %v199, %v215
    %vm217 = vcmask 57344
    %218 = vst.msk [vmem:[#allocation3] sm:$0x1] %vm217, %v216
    %219 = vst.msk [vmem:[#allocation2] sm:$0x1] %vm217, %v194
    // Predicated region
    $region38: #{tpu_custom_call.1} parent=1 // pred_check
      %p220 = pneg %p37
    $region39: #{tpu_custom_call.1} parent=1 // pred_check_branch
      %222 = sbr.rel (%p220) target = $region41
    $region40: #{tpu_custom_call.1} parent=1 // pred_region
      %v223 = vld [vmem:[#allocation2] sm:$0x1]
      %v224 = vld [vmem:[#allocation3] sm:$0x1]
      %v225 = vlog2.pop %v224
      %v226 = vmul.f32 %v225, 0.6931472
      %v227 = vadd.f32 %v223, %v226
      %v228 = vld [vmem:[#allocation7] sm:$0x1]
      %v229 = vsel %vm217, %v227, 0.0
      %230 = vadd.xlane.f32.xlu0 %v229
      %v231 = vpop.xlane.xlu0 %230
      %v232 = vrot.slane %v231, 4
      %v233 = vadd.f32 %v231, %v232
      %v234 = vrot.slane %v233, 2
      %v235 = vadd.f32 %v233, %v234
      %v236 = vrot.slane %v235, 1
      %v237 = vadd.f32 %v235, %v236
      %s238 = vtos %v237
      %v239 = vstv %s238
      %v240 = vadd.f32 %v228, %v239
      %vm241 = vcmask 0
      %242 = vst.msk [vmem:[#allocation7] sm:$0x1] %vm241, %v240
    $region41: #{tpu_custom_call.1} parent=1 // pred_fallthru
      _
    // Predicated region
    $region42: #{tpu_custom_call.1} parent=1 // pred_check
      _
    $region43: #{tpu_custom_call.1} parent=1 // pred_check_branch
      %244 = sbr.rel (%p39) target = $region45
    $region44: #{tpu_custom_call.1} parent=1 // pred_region
      %v245 = vld [vmem:[#allocation6] sm:$0x1]
      %v246 = vld [vmem:[#allocation7] sm:$0x1]
      %v247 = vadd.f32 %v245, %v246
      %v248 = vld [vmem:[#allocation8] sm:$0x1]
      %v249 = vmul.f32 %v248, 2.0
      %v250 = vsub.f32 %v247, %v249
      %v251 = vmul.f32 %v250, 0.0625
      %vm252 = vcmask 0
      %253 = vst.msk [vmem:[#allocation14] sm:$0x1] %vm252, %v251
    $region45: #{tpu_custom_call.1} parent=1 // pred_fallthru
      _
    // Predicated region
    $region46: #{tpu_custom_call.1} parent=1 // pred_check
      _
    $region47: #{tpu_custom_call.1} parent=1 // pred_check_branch
      %255 = sbr.rel (0) target = $region49
    $region48: #{tpu_custom_call.1} parent=1 // pred_region
      %s257 = ssub.s32 16, 16
      %258 = vsyncadd [#allocation11], %s257
      %s260 = sshll.u32 [#allocation14], 4
      %s261 = int_to_ptr.vmem [resolvable:$true] %s260
      %263 = dma.vmem_to_hbm [thread:$0]  %s261, 16, %s2, [#allocation11]
    $region49: #{tpu_custom_call.1} parent=1 // pred_fallthru
      _
    // Predicated region
    $region50: #{tpu_custom_call.1} parent=1 // pred_check
      _
    $region51: #{tpu_custom_call.1} parent=1 // pred_check_branch
      %265 = sbr.rel (0) target = $region53
    $region52: #{tpu_custom_call.1} parent=1 // pred_region
      %266 = dma.done [#allocation11], 16
    $region53: #{tpu_custom_call.1} parent=1 // pred_fallthru
      _
    %267 = vsyncpa [#allocation10], 1
    %268 = vsyncpa [#allocation13], 1
    %269 = vsyncpa [#allocation11], 1

</llo_original>
